<compile_context>
chip_gen: v7x
topology: tpu7x:2x2x1
jax: 0.10.0
libtpu: 0.0.40
codegen_flags: <defaults>
</compile_context>

<pallas_src>
import functools

import numpy as np
import jax
import jax.numpy as jnp
from jax.experimental import pallas as pl
from jax.experimental.pallas import tpu as pltpu

LANE = 128


def _cdiv(a, b):
    return -(-a // b)


def _round_up(n, m):
    return ((n + m - 1) // m) * m


# ----------------------------- Pallas kernel ------------------------------- #
def _mlp_posemb_kernel(xt_ref, scale_ref, shift_ref,
                       w1x_ref, w1p_ref, b1_ref,
                       w2_ref, b2_ref, w3_ref, b3_ref,
                       out_ref, *, dx, alpha1, alpha2):
    # Batch lives on the lane axis: every activation here is (features, TB).
    xt = xt_ref[...].astype(jnp.float32)                    # (input_dim, TB)
    phase = xt[dx:dx + 1, :]                                 # (1, TB) static sublane slice

    # Sinusoidal positional embedding, lane-dense:
    #   rows [0, half)        -> sin(phase * freq)
    #   rows [half, pose_dim) -> sin(phase * freq + pi/2) == cos(phase * freq)
    pe = jnp.sin(scale_ref[...] * phase + shift_ref[...])   # (pose_dim, TB)

    # Layer 1 + PReLU. w1x carries a zero column for the phase lane of x^T, so
    # feat = concat(raw, sin, cos) is realized as two small MXU pushes without
    # any lane slicing or concat.  Dropout(p=0.0) is the identity.
    h = (jnp.dot(w1x_ref[...], xt, preferred_element_type=jnp.float32)
         + jnp.dot(w1p_ref[...], pe, preferred_element_type=jnp.float32)
         + b1_ref[...])                                      # (latent, TB)
    h = jnp.where(h >= 0.0, h, alpha1 * h)

    # Hidden layer + PReLU.
    h = jnp.dot(w2_ref[...], h, preferred_element_type=jnp.float32) + b2_ref[...]
    h = jnp.where(h >= 0.0, h, alpha2 * h)

    # Output layer: (out_dim, TB) -> lane-dense, unmasked stores,
    # only out_dim * 4 bytes of HBM writeback per batch row.
    out_ref[...] = (jnp.dot(w3_ref[...], h, preferred_element_type=jnp.float32)
                    + b3_ref[...]).astype(out_ref.dtype)


# --------------------------------- wrapper --------------------------------- #
def mlp_posemb_forward(x, params, *, latent_dim, alpha1=0.25, alpha2=0.25,
                       block_cols=4096):
    """x: (B, input_dim) f32 or bf16, last column is the phase.
    params = (w1, b1, w2, b2, w3, b3); weights are (in_features, out_features),
    biases are (1, out_features).  Returns (B, output_dim) f32."""
    w1, b1, w2, b2, w3, b3 = params
    B, input_dim = x.shape
    dx = input_dim - 1
    pose_dim = latent_dim // 4
    half = pose_dim // 2
    in1 = dx + pose_dim
    latent = w1.shape[1]
    out_dim = w3.shape[1]
    assert w1.shape == (in1, latent_dim)

    # ---- frequency table (hoisted; tiny resident column operands) ----------
    i = np.arange(half)
    freq = (1.0 / 0.0001 ** (2.0 * (i // 2) / half)).astype(np.float32)
    scale = jnp.asarray(np.concatenate([freq, freq]).reshape(pose_dim, 1))
    shift = jnp.asarray(np.concatenate(
        [np.zeros(half, np.float32),
         np.full(half, np.pi / 2.0, np.float32)]).reshape(pose_dim, 1))

    # ---- weights kept transposed + resident: h^T = W^T @ x^T ---------------
    # (tiny one-time transforms; a real model would store them pre-transposed)
    w1x = jnp.concatenate([w1[:dx], jnp.zeros((1, latent), w1.dtype)],
                          axis=0).T                      # (latent, input_dim), phase col = 0
    w1p = w1[dx:].T                                      # (latent, pose_dim)
    w2t, w3t = w2.T, w3.T                                # (latent, latent), (out_dim, latent)
    b1c, b2c, b3c = b1.T, b2.T, b3.T                     # column biases

    # ---- lane tile: batch on the lane axis ----------------------------------
    # >= 2 grid steps whenever the batch spans more than one lane tile so the
    # "parallel" grid axis can shard across v7x's two TensorCores.
    n_steps = max(_cdiv(B, block_cols), 2 if B > LANE else 1)
    tb = _round_up(_cdiv(B, n_steps), LANE)
    b_pad = tb * n_steps

    # Single fused pad + transpose of the raw input.  No (B, in1) slab and no
    # wrapper-side phase broadcast: the embedding is built inside the kernel.
    xt = x.T if b_pad == B else jnp.pad(x, ((0, b_pad - B), (0, 0))).T   # (input_dim, b_pad)

    kernel = functools.partial(_mlp_posemb_kernel, dx=dx,
                               alpha1=float(alpha1), alpha2=float(alpha2))

    row_spec = pl.BlockSpec((input_dim, tb), lambda i: (0, i))
    out_spec = pl.BlockSpec((out_dim, tb), lambda i: (0, i))
    const = lambda a: pl.BlockSpec(a.shape, lambda i: (0, 0))   # resident operands

    w_bytes = 4 * (in1 * latent + latent * latent + latent * out_dim
                   + 2 * latent + out_dim + 2 * pose_dim)
    cost = pl.CostEstimate(
        flops=2 * B * (in1 * latent + latent * latent + latent * out_dim),
        transcendentals=B * pose_dim,
        bytes_accessed=B * (input_dim * x.dtype.itemsize + out_dim * 4) + w_bytes)

    outt = pl.pallas_call(
        kernel,
        out_shape=jax.ShapeDtypeStruct((out_dim, b_pad), jnp.float32),
        grid_spec=pltpu.PrefetchScalarGridSpec(
            num_scalar_prefetch=0,
            grid=(n_steps,),
            in_specs=[row_spec,
                      const(scale), const(shift),
                      const(w1x), const(w1p), const(b1c),
                      const(w2t), const(b2c),
                      const(w3t), const(b3c)],
            out_specs=out_spec,
        ),
        compiler_params=pltpu.CompilerParams(
            dimension_semantics=("parallel",)),   # shard batch tiles across TCs (v7x)
        cost_estimate=cost,
    )(xt, scale, shift, w1x, w1p, b1c, w2t, b2c, w3t, b3c)

    return outt[:, :B].T


# --------------------------- parameter construction ------------------------ #
def init_params(key, input_dim, output_dim, latent_dim):
    pose_dim = latent_dim // 4
    dx = input_dim - 1
    in1 = dx + pose_dim                       # MLP input dim

    def linear(k, fan_in, fan_out):
        kw, kb = jax.random.split(k)
        bound = 1.0 / jnp.sqrt(fan_in)
        w = jax.random.uniform(kw, (fan_in, fan_out), jnp.float32, -bound, bound)
        b = jax.random.uniform(kb, (1, fan_out), jnp.float32, -bound, bound)
        return w, b

    k1, k2, k3 = jax.random.split(key, 3)
    w1, b1 = linear(k1, in1, latent_dim)
    w2, b2 = linear(k2, latent_dim, latent_dim)
    w3, b3 = linear(k3, latent_dim, output_dim)
    return (w1, b1, w2, b2, w3, b3)


# ------------------------------ pure-JAX reference ------------------------- #
def ref_forward(x, params, alpha1, alpha2, latent_dim):
    w1, b1, w2, b2, w3, b3 = params
    pose_dim = latent_dim // 4
    half = pose_dim // 2
    phase = x[:, -1]
    i = jnp.arange(half)
    freq = 1.0 / 0.0001 ** (2.0 * (i // 2).astype(jnp.float32) / half)
    emb = phase[:, None] * freq[None, :]
    pe = jnp.concatenate([jnp.sin(emb), jnp.cos(emb)], axis=-1)
    feat = jnp.concatenate([x[:, :-1], pe], axis=1)
    h = feat @ w1 + b1
    h = jnp.where(h >= 0.0, h, alpha1 * h)
    h = h @ w2 + b2
    h = jnp.where(h >= 0.0, h, alpha2 * h)
    return h @ w3 + b3


# ---------------------------------- main ----------------------------------- #
if __name__ == "__main__":
    INPUT_DIM, OUTPUT_DIM, LATENT_DIM = 5, 3, 32   # n_hidden=1, dropout=0, no batch_norm
    key = jax.random.PRNGKey(0)
    kx1, kx2, kp = jax.random.split(key, 3)
    params = init_params(kp, INPUT_DIM, OUTPUT_DIM, LATENT_DIM)

    # Small batch (single grid step, lane padding exercised).
    x_small = jax.random.normal(kx1, (4, INPUT_DIM), jnp.float32)
    out_small = jax.block_until_ready(
        mlp_posemb_forward(x_small, params, latent_dim=LATENT_DIM))
    ref_small = ref_forward(x_small, params, 0.25, 0.25, LATENT_DIM)
    assert out_small.shape == (4, OUTPUT_DIM)
    assert jnp.allclose(out_small, ref_small, rtol=1e-3, atol=1e-3)

    # Larger non-multiple batch: >=2 grid steps (megacore path) + padding/slicing.
    x_big = jax.random.normal(kx2, (300, INPUT_DIM), jnp.float32)
    out_big = jax.block_until_ready(
        mlp_posemb_forward(x_big, params, latent_dim=LATENT_DIM))
    ref_big = ref_forward(x_big, params, 0.25, 0.25, LATENT_DIM)
    assert out_big.shape == (300, OUTPUT_DIM)
    assert jnp.allclose(out_big, ref_big, rtol=1e-3, atol=1e-3)

    # bf16-streamed input (halves the dominant input DMA); in-kernel math is f32.
    x_bf16 = x_big.astype(jnp.bfloat16)
    out_bf16 = jax.block_until_ready(
        mlp_posemb_forward(x_bf16, params, latent_dim=LATENT_DIM))
    ref_bf16 = ref_forward(x_bf16.astype(jnp.float32), params, 0.25, 0.25, LATENT_DIM)
    assert out_bf16.shape == (300, OUTPUT_DIM)
    assert jnp.allclose(out_bf16, ref_bf16, rtol=1e-3, atol=1e-3)

    print("KERNEL_OK")
</pallas_src>

<mosaic_0001>
module attributes {stable_mosaic.version = 11 : i64} {
  func.func @_mlp_posemb_kernel(%arg0: i32, %arg1: memref<5x128xf32, #tpu.memory_space<vmem>>, %arg2: memref<8x1xf32, #tpu.memory_space<vmem>>, %arg3: memref<8x1xf32, #tpu.memory_space<vmem>>, %arg4: memref<32x5xf32, #tpu.memory_space<vmem>>, %arg5: memref<32x8xf32, #tpu.memory_space<vmem>>, %arg6: memref<32x1xf32, #tpu.memory_space<vmem>>, %arg7: memref<32x32xf32, #tpu.memory_space<vmem>>, %arg8: memref<32x1xf32, #tpu.memory_space<vmem>>, %arg9: memref<3x32xf32, #tpu.memory_space<vmem>>, %arg10: memref<3x1xf32, #tpu.memory_space<vmem>>, %arg11: memref<3x128xf32, #tpu.memory_space<vmem>>) attributes {dimension_semantics = [#tpu.dimension_semantics<parallel>], iteration_bounds = array<i64: 1>, scalar_prefetch = 0 : i64, scratch_operands = 0 : i64, tpu.core_type = #tpu.core_type<tc>, window_params = [{transform_indices = @transform_0, window_bounds = array<i64: 5, 128>}, {pipeline_mode = #tpu.pipeline_mode<synchronous>, transform_indices = @transform_1, window_bounds = array<i64: 8, 1>}, {pipeline_mode = #tpu.pipeline_mode<synchronous>, transform_indices = @transform_2, window_bounds = array<i64: 8, 1>}, {pipeline_mode = #tpu.pipeline_mode<synchronous>, transform_indices = @transform_3, window_bounds = array<i64: 32, 5>}, {pipeline_mode = #tpu.pipeline_mode<synchronous>, transform_indices = @transform_4, window_bounds = array<i64: 32, 8>}, {pipeline_mode = #tpu.pipeline_mode<synchronous>, transform_indices = @transform_5, window_bounds = array<i64: 32, 1>}, {pipeline_mode = #tpu.pipeline_mode<synchronous>, transform_indices = @transform_6, window_bounds = array<i64: 32, 32>}, {pipeline_mode = #tpu.pipeline_mode<synchronous>, transform_indices = @transform_7, window_bounds = array<i64: 32, 1>}, {pipeline_mode = #tpu.pipeline_mode<synchronous>, transform_indices = @transform_8, window_bounds = array<i64: 3, 32>}, {pipeline_mode = #tpu.pipeline_mode<synchronous>, transform_indices = @transform_9, window_bounds = array<i64: 3, 1>}, {transform_indices = @transform_10, window_bounds = array<i64: 3, 128>}]} {
    %c0 = arith.constant 0 : index
    %c0_0 = arith.constant 0 : index
    %0 = vector.load %arg1[%c0, %c0_0] : memref<5x128xf32, #tpu.memory_space<vmem>>, vector<5x128xf32>
    %1 = vector.extract_strided_slice %0 {offsets = [4, 0], sizes = [1, 128], strides = [1, 1]} : vector<5x128xf32> to vector<1x128xf32>
    %c0_1 = arith.constant 0 : index
    %c0_2 = arith.constant 0 : index
    %2 = vector.load %arg2[%c0_1, %c0_2] : memref<8x1xf32, #tpu.memory_space<vmem>>, vector<8x1xf32>
    %3 = vector.broadcast %2 : vector<8x1xf32> to vector<8x128xf32>
    %4 = vector.broadcast %1 : vector<1x128xf32> to vector<8x128xf32>
    %5 = arith.mulf %3, %4 : vector<8x128xf32>
    %c0_3 = arith.constant 0 : index
    %c0_4 = arith.constant 0 : index
    %6 = vector.load %arg3[%c0_3, %c0_4] : memref<8x1xf32, #tpu.memory_space<vmem>>, vector<8x1xf32>
    %7 = vector.broadcast %6 : vector<8x1xf32> to vector<8x128xf32>
    %8 = arith.addf %5, %7 : vector<8x128xf32>
    %9 = math.sin %8 : vector<8x128xf32>
    %c0_5 = arith.constant 0 : index
    %c0_6 = arith.constant 0 : index
    %10 = vector.load %arg4[%c0_5, %c0_6] : memref<32x5xf32, #tpu.memory_space<vmem>>, vector<32x5xf32>
    %cst = arith.constant dense<0.000000e+00> : vector<32x128xf32>
    %11 = tpu.matmul %10, %0, %cst {dimension_numbers = #tpu.dot_dimension_numbers<[1], [0], [0], [1], [0, 0, 1, 1], [], []>} : vector<32x5xf32>, vector<5x128xf32>, vector<32x128xf32> -> vector<32x128xf32>
    %c0_7 = arith.constant 0 : index
    %c0_8 = arith.constant 0 : index
    %12 = vector.load %arg5[%c0_7, %c0_8] : memref<32x8xf32, #tpu.memory_space<vmem>>, vector<32x8xf32>
    %cst_9 = arith.constant dense<0.000000e+00> : vector<32x128xf32>
    %13 = tpu.matmul %12, %9, %cst_9 {dimension_numbers = #tpu.dot_dimension_numbers<[1], [0], [0], [1], [0, 0, 1, 1], [], []>} : vector<32x8xf32>, vector<8x128xf32>, vector<32x128xf32> -> vector<32x128xf32>
    %14 = arith.addf %11, %13 : vector<32x128xf32>
    %c0_10 = arith.constant 0 : index
    %c0_11 = arith.constant 0 : index
    %15 = vector.load %arg6[%c0_10, %c0_11] : memref<32x1xf32, #tpu.memory_space<vmem>>, vector<32x1xf32>
    %16 = vector.broadcast %15 : vector<32x1xf32> to vector<32x128xf32>
    %17 = arith.addf %14, %16 : vector<32x128xf32>
    %cst_12 = arith.constant 0.000000e+00 : f32
    %18 = vector.broadcast %cst_12 : f32 to vector<32x128xf32>
    %19 = arith.cmpf oge, %17, %18 : vector<32x128xf32>
    %cst_13 = arith.constant 2.500000e-01 : f32
    %20 = vector.broadcast %cst_13 : f32 to vector<32x128xf32>
    %21 = arith.mulf %20, %17 : vector<32x128xf32>
    %22 = arith.select %19, %17, %21 : vector<32x128xi1>, vector<32x128xf32>
    %c0_14 = arith.constant 0 : index
    %c0_15 = arith.constant 0 : index
    %23 = vector.load %arg7[%c0_14, %c0_15] : memref<32x32xf32, #tpu.memory_space<vmem>>, vector<32x32xf32>
    %cst_16 = arith.constant dense<0.000000e+00> : vector<32x128xf32>
    %24 = tpu.matmul %23, %22, %cst_16 {dimension_numbers = #tpu.dot_dimension_numbers<[1], [0], [0], [1], [0, 0, 1, 1], [], []>} : vector<32x32xf32>, vector<32x128xf32>, vector<32x128xf32> -> vector<32x128xf32>
    %c0_17 = arith.constant 0 : index
    %c0_18 = arith.constant 0 : index
    %25 = vector.load %arg8[%c0_17, %c0_18] : memref<32x1xf32, #tpu.memory_space<vmem>>, vector<32x1xf32>
    %26 = vector.broadcast %25 : vector<32x1xf32> to vector<32x128xf32>
    %27 = arith.addf %24, %26 : vector<32x128xf32>
    %cst_19 = arith.constant 0.000000e+00 : f32
    %28 = vector.broadcast %cst_19 : f32 to vector<32x128xf32>
    %29 = arith.cmpf oge, %27, %28 : vector<32x128xf32>
    %cst_20 = arith.constant 2.500000e-01 : f32
    %30 = vector.broadcast %cst_20 : f32 to vector<32x128xf32>
    %31 = arith.mulf %30, %27 : vector<32x128xf32>
    %32 = arith.select %29, %27, %31 : vector<32x128xi1>, vector<32x128xf32>
    %c0_21 = arith.constant 0 : index
    %c0_22 = arith.constant 0 : index
    %33 = vector.load %arg9[%c0_21, %c0_22] : memref<3x32xf32, #tpu.memory_space<vmem>>, vector<3x32xf32>
    %cst_23 = arith.constant dense<0.000000e+00> : vector<3x128xf32>
    %34 = tpu.matmul %33, %32, %cst_23 {dimension_numbers = #tpu.dot_dimension_numbers<[1], [0], [0], [1], [0, 0, 1, 1], [], []>} : vector<3x32xf32>, vector<32x128xf32>, vector<3x128xf32> -> vector<3x128xf32>
    %c0_24 = arith.constant 0 : index
    %c0_25 = arith.constant 0 : index
    %35 = vector.load %arg10[%c0_24, %c0_25] : memref<3x1xf32, #tpu.memory_space<vmem>>, vector<3x1xf32>
    %36 = vector.broadcast %35 : vector<3x1xf32> to vector<3x128xf32>
    %37 = arith.addf %34, %36 : vector<3x128xf32>
    %c0_26 = arith.constant 0 : index
    %c0_27 = arith.constant 0 : index
    %38 = vector.load %arg11[%c0_26, %c0_27] : memref<3x128xf32, #tpu.memory_space<vmem>>, vector<3x128xf32>
    tpu.vector_store %arg11[%c0_26, %c0_27], %37 {strides = array<i32>} : memref<3x128xf32, #tpu.memory_space<vmem>>, vector<3x128xf32>,
    return
  }
  func.func @transform_0(%arg0: i32) -> (i32, i32) {
    %c0_i32 = arith.constant 0 : i32
    %c0_i32_0 = arith.constant 0 : i32
    return %c0_i32, %arg0 : i32, i32
  }
  func.func @transform_1(%arg0: i32) -> (i32, i32) {
    %c0_i32 = arith.constant 0 : i32
    %c0_i32_0 = arith.constant 0 : i32
    %c0_i32_1 = arith.constant 0 : i32
    return %c0_i32, %c0_i32_0 : i32, i32
  }
  func.func @transform_2(%arg0: i32) -> (i32, i32) {
    %c0_i32 = arith.constant 0 : i32
    %c0_i32_0 = arith.constant 0 : i32
    %c0_i32_1 = arith.constant 0 : i32
    return %c0_i32, %c0_i32_0 : i32, i32
  }
  func.func @transform_3(%arg0: i32) -> (i32, i32) {
    %c0_i32 = arith.constant 0 : i32
    %c0_i32_0 = arith.constant 0 : i32
    %c0_i32_1 = arith.constant 0 : i32
    return %c0_i32, %c0_i32_0 : i32, i32
  }
  func.func @transform_4(%arg0: i32) -> (i32, i32) {
    %c0_i32 = arith.constant 0 : i32
    %c0_i32_0 = arith.constant 0 : i32
    %c0_i32_1 = arith.constant 0 : i32
    return %c0_i32, %c0_i32_0 : i32, i32
  }
  func.func @transform_5(%arg0: i32) -> (i32, i32) {
    %c0_i32 = arith.constant 0 : i32
    %c0_i32_0 = arith.constant 0 : i32
    %c0_i32_1 = arith.constant 0 : i32
    return %c0_i32, %c0_i32_0 : i32, i32
  }
  func.func @transform_6(%arg0: i32) -> (i32, i32) {
    %c0_i32 = arith.constant 0 : i32
    %c0_i32_0 = arith.constant 0 : i32
    %c0_i32_1 = arith.constant 0 : i32
    return %c0_i32, %c0_i32_0 : i32, i32
  }
  func.func @transform_7(%arg0: i32) -> (i32, i32) {
    %c0_i32 = arith.constant 0 : i32
    %c0_i32_0 = arith.constant 0 : i32
    %c0_i32_1 = arith.constant 0 : i32
    return %c0_i32, %c0_i32_0 : i32, i32
  }
  func.func @transform_8(%arg0: i32) -> (i32, i32) {
    %c0_i32 = arith.constant 0 : i32
    %c0_i32_0 = arith.constant 0 : i32
    %c0_i32_1 = arith.constant 0 : i32
    return %c0_i32, %c0_i32_0 : i32, i32
  }
  func.func @transform_9(%arg0: i32) -> (i32, i32) {
    %c0_i32 = arith.constant 0 : i32
    %c0_i32_0 = arith.constant 0 : i32
    %c0_i32_1 = arith.constant 0 : i32
    return %c0_i32, %c0_i32_0 : i32, i32
  }
  func.func @transform_10(%arg0: i32) -> (i32, i32) {
    %c0_i32 = arith.constant 0 : i32
    %c0_i32_0 = arith.constant 0 : i32
    return %c0_i32, %arg0 : i32, i32
  }
}

</mosaic_0001>

<llo_original>
// kernel: tpu_custom_call.1
$region0: #{tpu_custom_call.1}
  #allocation0 [shape = 'u32[]', space=smem, size = 0x4, offset = 0x4, fixed_abs, tag = 'smem constant byte address 0x4 - core index']
  #allocation1 [shape = 'u32[144,128]{1,0:T(1,128)}', space=vmem, size = 0x12000, scoped, tag = 'internal scratch']
  %s0 = inlined_call_operand.vmem [shape: f32[5,128], index: 0, kind: input, shape index: {}]
  %s1 = inlined_call_operand.vmem [shape: f32[8,1], index: 1, kind: input, shape index: {}]
  %s2 = inlined_call_operand.vmem [shape: f32[8,1], index: 2, kind: input, shape index: {}]
  %s3 = inlined_call_operand.vmem [shape: f32[32,5], index: 3, kind: input, shape index: {}]
  %s4 = inlined_call_operand.vmem [shape: f32[32,8], index: 4, kind: input, shape index: {}]
  %s5 = inlined_call_operand.vmem [shape: f32[32,1], index: 5, kind: input, shape index: {}]
  %s6 = inlined_call_operand.vmem [shape: f32[32,32], index: 6, kind: input, shape index: {}]
  %s7 = inlined_call_operand.vmem [shape: f32[32,1], index: 7, kind: input, shape index: {}]
  %s8 = inlined_call_operand.vmem [shape: f32[3,32], index: 8, kind: input, shape index: {}]
  %s9 = inlined_call_operand.vmem [shape: f32[3,1], index: 9, kind: input, shape index: {}]
  %s10 = inlined_call_operand.hbm [shape: f32[3,128], index: 10, kind: output, shape index: {}]
  %s11 = sld [smem:[#allocation0]]
  $region50: #{tpu_custom_call.1} parent=0
    _
  %s13 = ssub.s32 1, %s11
  %s14 = scalar_select 0, %s13, %s11
  $region1: #{tpu_custom_call.1} parent=0
    #allocation2 [shape = 'u8[2048]{0}', space=vmem, size = 0x800, scoped, tag = 'output window, operand 0, single buffered']
    #allocation3 [shape = 's32[1]{0}', space=sflag, size = 0x4, scoped, tag = 'scoped memory for tpu_custom_call.1']
    %15 = vsyncpa [#allocation3], 0
    // Predicated region
    $region2: #{tpu_custom_call.1} parent=1 // pred_check
      _
    $region3: #{tpu_custom_call.1} parent=1 // pred_check_branch
      %17 = sbr.rel (0) target = $region5
    $region4: #{tpu_custom_call.1} parent=1 // pred_region
      _
    $region5: #{tpu_custom_call.1} parent=1 // pred_fallthru
      _
    // Predicated region
    $region6: #{tpu_custom_call.1} parent=1 // pred_check
      _
    $region7: #{tpu_custom_call.1} parent=1 // pred_check_branch
      %19 = sbr.rel (0) target = $region9
    $region8: #{tpu_custom_call.1} parent=1 // pred_region
      _
    $region9: #{tpu_custom_call.1} parent=1 // pred_fallthru
      _
    // Predicated region
    $region10: #{tpu_custom_call.1} parent=1 // pred_check
      _
    $region11: #{tpu_custom_call.1} parent=1 // pred_check_branch
      %21 = sbr.rel (0) target = $region13
    $region12: #{tpu_custom_call.1} parent=1 // pred_region
      _
    $region13: #{tpu_custom_call.1} parent=1 // pred_fallthru
      _
    // Predicated region
    $region14: #{tpu_custom_call.1} parent=1 // pred_check
      _
    $region15: #{tpu_custom_call.1} parent=1 // pred_check_branch
      %23 = sbr.rel (0) target = $region17
    $region16: #{tpu_custom_call.1} parent=1 // pred_region
      _
    $region17: #{tpu_custom_call.1} parent=1 // pred_fallthru
      _
    // Predicated region
    $region18: #{tpu_custom_call.1} parent=1 // pred_check
      _
    $region19: #{tpu_custom_call.1} parent=1 // pred_check_branch
      %25 = sbr.rel (0) target = $region21
    $region20: #{tpu_custom_call.1} parent=1 // pred_region
      _
    $region21: #{tpu_custom_call.1} parent=1 // pred_fallthru
      _
    // Predicated region
    $region22: #{tpu_custom_call.1} parent=1 // pred_check
      _
    $region23: #{tpu_custom_call.1} parent=1 // pred_check_branch
      %27 = sbr.rel (0) target = $region25
    $region24: #{tpu_custom_call.1} parent=1 // pred_region
      _
    $region25: #{tpu_custom_call.1} parent=1 // pred_fallthru
      _
    // Predicated region
    $region26: #{tpu_custom_call.1} parent=1 // pred_check
      _
    $region27: #{tpu_custom_call.1} parent=1 // pred_check_branch
      %29 = sbr.rel (0) target = $region29
    $region28: #{tpu_custom_call.1} parent=1 // pred_region
      _
    $region29: #{tpu_custom_call.1} parent=1 // pred_fallthru
      _
    // Predicated region
    $region30: #{tpu_custom_call.1} parent=1 // pred_check
      _
    $region31: #{tpu_custom_call.1} parent=1 // pred_check_branch
      %31 = sbr.rel (0) target = $region33
    $region32: #{tpu_custom_call.1} parent=1 // pred_region
      _
    $region33: #{tpu_custom_call.1} parent=1 // pred_fallthru
      _
    // Predicated region
    $region34: #{tpu_custom_call.1} parent=1 // pred_check
      _
    $region35: #{tpu_custom_call.1} parent=1 // pred_check_branch
      %33 = sbr.rel (0) target = $region37
    $region36: #{tpu_custom_call.1} parent=1 // pred_region
      _
    $region37: #{tpu_custom_call.1} parent=1 // pred_fallthru
      _
    // Predicated region
    $region38: #{tpu_custom_call.1} parent=1 // pred_check
      _
    $region39: #{tpu_custom_call.1} parent=1 // pred_check_branch
      %35 = sbr.rel (0) target = $region41
    $region40: #{tpu_custom_call.1} parent=1 // pred_region
      _
    $region41: #{tpu_custom_call.1} parent=1 // pred_fallthru
      _
    %v36 = vld [vmem:[%s0] sm:$0x1f]
    %v37 = vld [vmem:[%s1] sm:$0xff]
    %39 = vset.pattern.permute.xlu0 0
    %40 = vperm.xlu0 %39, %v37
    %v41 = vpop.permute.xlu0 %40
    %v43 = vlaneseq
    %v44 = vshrl.u32 %v43, 7
    %v45 = vsub.s32 4, %v44
    %v46 = vrot.slane %v36, %v45
    %v47 = vmul.f32 %v41, %v46
    %v48 = vld [vmem:[%s2] sm:$0xff]
    %50 = vset.pattern.permute.xlu0 0
    %51 = vperm.xlu0 %50, %v48
    %v52 = vpop.permute.xlu0 %51
    %v54 = vadd.f32 %v47, %v52
    %v55 = vand.u32 2147483647, %v54
    %vm56 = vcmp.le.f32.partialorder %v55, 0.7853982
    %vm57 = vcmp.lt.s32.totalorder %v54, 0
    %v58 = vand.u32 %v54, 2139095040
    %v59 = vshrl.u32 %v58, 23
    %v60 = vsub.s32 %v59, 127
    %v61 = vand.u32 2147483647, %v54
    %v62 = vand.u32 %v61, 8388607
    %v63 = vor.u32 %v62, 8388608
    %v64 = vsub.s32 0, %v63
    %v65 = vadd.s32 %v60, 1
    %vm66 = vcmp.gt.s32.totalorder %v65, 0
    %v67 = vsel %vm66, %v65, 0
    %v68 = vshrl.u32 %v67, 5
    %v69 = vand.u32 %v67, 31
    %v70 = vsub.s32 32, %v69
    %v71 = vshrl.u32 683565275, %v70
    %v72 = vshll.u32 683565275, %v69
    %v73 = vshrl.u32 2475754826, %v70
    %v74 = vor.u32 %v72, %v73
    %v75 = vshll.u32 2475754826, %v69
    %v76 = vshrl.u32 2131351028, %v70
    %v77 = vor.u32 %v75, %v76
    %v78 = vshll.u32 2131351028, %v69
    %v79 = vshrl.u32 2102212464, %v70
    %v80 = vor.u32 %v78, %v79
    %v81 = vshll.u32 2102212464, %v69
    %v82 = vshrl.u32 920167782, %v70
    %v83 = vor.u32 %v81, %v82
    %v84 = vshll.u32 920167782, %v69
    %v85 = vshrl.u32 1326507024, %v70
    %v86 = vor.u32 %v84, %v85
    %vm87 = vcmp.lt.s32.totalorder %v68, 1
    %vm88 = vcmp.lt.s32.totalorder %v68, 2
    %vm89 = vcmp.lt.s32.totalorder %v68, 3
    %vm90 = vcmp.lt.s32.totalorder %v68, 4
    %v91 = vsel %vm87, %v71, %v74
    %v92 = vsel %vm90, %v80, 2102212464
    %v93 = vsel %vm89, %v77, %v92
    %v94 = vsel %vm88, %v91, %v93
    %v95 = vsel %vm87, %v74, %v77
    %v96 = vsel %vm90, %v83, 920167782
    %v97 = vsel %vm89, %v80, %v96
    %v98 = vsel %vm88, %v95, %v97
    %v99 = vsel %vm87, %v77, %v80
    %v100 = vsel %vm90, %v86, 1326507024
    %v101 = vsel %vm89, %v83, %v100
    %v102 = vsel %vm88, %v99, %v101
    %v103 = vshll.u32 %v63, 8
    %v104 = vmul.u32.u64.compose %v103, %v102
    %v105 = vextract.low.u32 %v104
    %v106 = vextract.high.u32 %v104
    %v107 = vmul.u32.u64.compose %v103, %v98
    %v108 = vextract.low.u32 %v107
    %v109 = vextract.high.u32 %v107
    %v110 = vmul.u32 %v103, %v94
    %v111 = vadd.s32 %v106, %v108
    %vm112 = vc.u32 %v106, %v108
    %v113 = vadd.s32 %v109, 1
    %v114 = vsel %vm112, %v113, %v109
    %v115 = vadd.s32 %v110, %v114
    %v116 = vadd.s32 %v115, 536870912
    %v117 = vshrl.u32 %v116, 30
    %v118 = vshll.u32 %v117, 30
    %v119 = vsub.s32 %v115, %v118
    %vm120 = vcmp.lt.s32.totalorder %v119, 0
    %v121 = vsub.s32 0, %v119
    %v122 = vsel %vm120, %v121, %v119
    %v123 = vclz %v122
    %v124 = vsub.s32 %v123, 2
    %vm125 = vcmp.gt.s32.totalorder 0, %v124
    %v126 = vsel %vm125, 0, %v124
    %v127 = vsub.s32 32, %v126
    %v128 = vshll.u32 %v119, %v126
    %v129 = vshrl.u32 %v111, %v127
    %v130 = vor.u32 %v128, %v129
    %v131 = vsub.s32 4294967266, %v126
    %v132 = vadd.s32 %v131, 127
    %v133 = vshll.u32 %v132, 23
    %v134 = vor.u32 4788187, %v133
    %v135 = vand.u32 2147483647, %v134
    %v137 = vcvt.s32.f32 %v130
    %v138 = vmul.f32 %v137, %v135
    %v139 = vxor.u32 %v138, 2147483648
    %v140 = vsel %vm57, %v139, %v138
    %v141 = vsub.s32 4, %v117
    %v142 = vsel %vm57, %v141, %v117
    %v143 = vsel %vm56, %v54, %v140
    %v144 = vsel %vm56, 0, %v142
    %v145 = vcosq.f32.pop %v143
    %v146 = vsinq.f32.pop %v143
    %vm147 = vweird.f32 %v54
    %v148 = vadd.s32 %v144, 3
    %v149 = vand.u32 %v148, 3
    %vm150 = vcmp.lt.s32.totalorder %v149, 2
    %vm151 = vcmp.eq.s32.totalorder %v149, 0
    %v152 = vxor.u32 %v146, 2147483648
    %v153 = vsel %vm151, %v145, %v152
    %vm154 = vcmp.eq.s32.totalorder %v149, 2
    %v155 = vxor.u32 %v145, 2147483648
    %v156 = vsel %vm154, %v155, %v146
    %v157 = vsel %vm150, %v153, %v156
    %v158 = vsel %vm147, nan, %v157
    %v159 = vld [vmem:[%s3] sm:$0xff]
    %v160 = vld [vmem:[%s3 + $0x8] sm:$0xff]
    %v161 = vld [vmem:[%s3 + $0x10] sm:$0xff]
    %v162 = vld [vmem:[%s3 + $0x18] sm:$0xff]
    %v163 = vld [vmem:[%s4] sm:$0xff]
    %v164 = vld [vmem:[%s4 + $0x8] sm:$0xff]
    %v165 = vld [vmem:[%s4 + $0x10] sm:$0xff]
    %v166 = vld [vmem:[%s4 + $0x18] sm:$0xff]
    %vm167 = vcmask 64512
    %v169 = vsel %vm167, %v163, 0
    %v172 = vsel %vm167, %v164, 0
    %v175 = vsel %vm167, %v165, 0
    %v178 = vsel %vm167, %v166, 0
    %180 = vmatprep.subr.mxu0 0.0
    %181 = vmatpush1.msra.mxu0 %v158
    %182 = vmatprep.subr.mxu0 0.0
    %183 = vmatpush1.msra.mxu0 0.0
    %184 = vmatprep.subr.mxu0 0.0
    %185 = vmatpush1.msra.mxu0 0.0
    %186 = vmatprep.subr.mxu0 0.0
    %187 = vmatpush1.msra.mxu0 0.0
    %188 = vmatprep.subr.mxu0 0.0
    %189 = vmatpush1.msra.mxu0 0.0
    %190 = vmatprep.subr.mxu0 0.0
    %191 = vmatpush1.msra.mxu0 0.0
    %192 = vmatprep.subr.mxu0 0.0
    %193 = vmatpush1.msra.mxu0 0.0
    %194 = vmatprep.subr.mxu0 0.0
    %195 = vmatpush1.msra.mxu0 0.0
    %196 = vmatprep.subr.mxu0 0.0
    %197 = vmatpush1.msra.mxu0 0.0
    %198 = vmatprep.subr.mxu0 0.0
    %199 = vmatpush1.msra.mxu0 0.0
    %200 = vmatprep.subr.mxu0 0.0
    %201 = vmatpush1.msra.mxu0 0.0
    %202 = vmatprep.subr.mxu0 0.0
    %203 = vmatpush1.msra.mxu0 0.0
    %204 = vmatprep.subr.mxu0 0.0
    %205 = vmatpush1.msra.mxu0 0.0
    %206 = vmatprep.subr.mxu0 0.0
    %207 = vmatpush1.msra.mxu0 0.0
    %208 = vmatprep.subr.mxu0 0.0
    %209 = vmatpush1.msra.mxu0 0.0
    %210 = vmatprep.subr.mxu0 0.0
    %211 = vmatpush1.msra.mxu0 0.0
    %212 = vmatprep.subr.mxu0 0.0
    %213 = vmatpush1.msra.mxu0 0.0
    %214 = vmatprep.subr.mxu0 0.0
    %215 = vmatpush1.msra.mxu0 0.0
    %216 = vmatprep.subr.mxu0 0.0
    %217 = vmatpush1.msra.mxu0 0.0
    %218 = vmatprep.subr.mxu0 0.0
    %219 = vmatpush1.msra.mxu0 0.0
    %220 = vmatprep.subr.mxu0 0.0
    %221 = vmatpush1.msra.mxu0 0.0
    %222 = vmatprep.subr.mxu0 0.0
    %223 = vmatpush1.msra.mxu0 0.0
    %224 = vmatprep.subr.mxu0 0.0
    %225 = vmatpush1.msra.mxu0 0.0
    %226 = vmatprep.subr.mxu0 0.0
    %227 = vmatpush1.msra.mxu0 0.0
    %228 = vmatprep.subr.mxu0 0.0
    %229 = vmatpush1.msra.mxu0 0.0
    %230 = vmatprep.subr.mxu0 0.0
    %231 = vmatpush1.msra.mxu0 0.0
    %232 = vmatprep.subr.mxu0 0.0
    %233 = vmatpush1.msra.mxu0 0.0
    %234 = vmatprep.subr.mxu0 0.0
    %235 = vmatpush1.msra.mxu0 0.0
    %236 = vmatprep.subr.mxu0 0.0
    %237 = vmatpush1.msra.mxu0 0.0
    %238 = vmatprep.subr.mxu0 0.0
    %239 = vmatpush1.msra.mxu0 0.0
    %240 = vmatprep.subr.mxu0 0.0
    %241 = vmatpush1.msra.mxu0 0.0
    %242 = vmatprep.subr.mxu0 0.0
    %243 = vmatpush1.msra.mxu0 0.0
    %244 = vmatprep.mubr.f32.mxu0 0.0
    %245 = vmatmul.mubr.f32.gmra.mrb[0].mxu0 %v169
    %v246 = vpop.f32.mrb[0].mxu0
    %v247 = vadd.f32 0.0, %v246
    %v248 = vpop.f32.mrb[0].mxu0
    %249 = vmatprep.mubr.f32.mxu0 0.0
    %250 = vmatmul.mubr.f32.gmra.mrb[0].mxu0 %v172
    %v251 = vpop.f32.mrb[0].mxu0
    %v252 = vadd.f32 0.0, %v251
    %v253 = vpop.f32.mrb[0].mxu0
    %254 = vmatprep.mubr.f32.mxu0 0.0
    %255 = vmatmul.mubr.f32.gmra.mrb[0].mxu0 %v175
    %v256 = vpop.f32.mrb[0].mxu0
    %v257 = vadd.f32 0.0, %v256
    %v258 = vpop.f32.mrb[0].mxu0
    %259 = vmatprep.mubr.f32.mxu0 0.0
    %260 = vmatmul.mubr.f32.gmra.mrb[0].mxu0 %v178
    %v261 = vpop.f32.mrb[0].mxu0
    %v262 = vadd.f32 0.0, %v261
    %v263 = vpop.f32.mrb[0].mxu0
    %264 = vdwg.mxu0
    %vm265 = vcmask 39936
    %v267 = vsel %vm265, %v159, 0
    %v270 = vsel %vm265, %v160, 0
    %v273 = vsel %vm265, %v161, 0
    %v276 = vsel %vm265, %v162, 0
    %vm278 = vcmask 1044480
    %v280 = vsel %vm278, %v36, 0
    %282 = vmatprep.subr.mxu0 0.0
    %283 = vmatpush1.msra.mxu0 %v280
    %284 = vmatprep.subr.mxu0 0.0
    %285 = vmatpush1.msra.mxu0 0.0
    %286 = vmatprep.subr.mxu0 0.0
    %287 = vmatpush1.msra.mxu0 0.0
    %288 = vmatprep.subr.mxu0 0.0
    %289 = vmatpush1.msra.mxu0 0.0
    %290 = vmatprep.subr.mxu0 0.0
    %291 = vmatpush1.msra.mxu0 0.0
    %292 = vmatprep.subr.mxu0 0.0
    %293 = vmatpush1.msra.mxu0 0.0
    %294 = vmatprep.subr.mxu0 0.0
    %295 = vmatpush1.msra.mxu0 0.0
    %296 = vmatprep.subr.mxu0 0.0
    %297 = vmatpush1.msra.mxu0 0.0
    %298 = vmatprep.subr.mxu0 0.0
    %299 = vmatpush1.msra.mxu0 0.0
    %300 = vmatprep.subr.mxu0 0.0
    %301 = vmatpush1.msra.mxu0 0.0
    %302 = vmatprep.subr.mxu0 0.0
    %303 = vmatpush1.msra.mxu0 0.0
    %304 = vmatprep.subr.mxu0 0.0
    %305 = vmatpush1.msra.mxu0 0.0
    %306 = vmatprep.subr.mxu0 0.0
    %307 = vmatpush1.msra.mxu0 0.0
    %308 = vmatprep.subr.mxu0 0.0
    %309 = vmatpush1.msra.mxu0 0.0
    %310 = vmatprep.subr.mxu0 0.0
    %311 = vmatpush1.msra.mxu0 0.0
    %312 = vmatprep.subr.mxu0 0.0
    %313 = vmatpush1.msra.mxu0 0.0
    %314 = vmatprep.subr.mxu0 0.0
    %315 = vmatpush1.msra.mxu0 0.0
    %316 = vmatprep.subr.mxu0 0.0
    %317 = vmatpush1.msra.mxu0 0.0
    %318 = vmatprep.subr.mxu0 0.0
    %319 = vmatpush1.msra.mxu0 0.0
    %320 = vmatprep.subr.mxu0 0.0
    %321 = vmatpush1.msra.mxu0 0.0
    %322 = vmatprep.subr.mxu0 0.0
    %323 = vmatpush1.msra.mxu0 0.0
    %324 = vmatprep.subr.mxu0 0.0
    %325 = vmatpush1.msra.mxu0 0.0
    %326 = vmatprep.subr.mxu0 0.0
    %327 = vmatpush1.msra.mxu0 0.0
    %328 = vmatprep.subr.mxu0 0.0
    %329 = vmatpush1.msra.mxu0 0.0
    %330 = vmatprep.subr.mxu0 0.0
    %331 = vmatpush1.msra.mxu0 0.0
    %332 = vmatprep.subr.mxu0 0.0
    %333 = vmatpush1.msra.mxu0 0.0
    %334 = vmatprep.subr.mxu0 0.0
    %335 = vmatpush1.msra.mxu0 0.0
    %336 = vmatprep.subr.mxu0 0.0
    %337 = vmatpush1.msra.mxu0 0.0
    %338 = vmatprep.subr.mxu0 0.0
    %339 = vmatpush1.msra.mxu0 0.0
    %340 = vmatprep.subr.mxu0 0.0
    %341 = vmatpush1.msra.mxu0 0.0
    %342 = vmatprep.subr.mxu0 0.0
    %343 = vmatpush1.msra.mxu0 0.0
    %344 = vmatprep.subr.mxu0 0.0
    %345 = vmatpush1.msra.mxu0 0.0
    %346 = vmatprep.mubr.f32.mxu0 0.0
    %347 = vmatmul.mubr.f32.gmra.mrb[0].mxu0 %v267
    %v348 = vpop.f32.mrb[0].mxu0
    %v349 = vadd.f32 %v247, %v348
    %v350 = vpop.f32.mrb[0].mxu0
    %351 = vmatprep.mubr.f32.mxu0 0.0
    %352 = vmatmul.mubr.f32.gmra.mrb[0].mxu0 %v270
    %v353 = vpop.f32.mrb[0].mxu0
    %v354 = vadd.f32 %v252, %v353
    %v355 = vpop.f32.mrb[0].mxu0
    %356 = vmatprep.mubr.f32.mxu0 0.0
    %357 = vmatmul.mubr.f32.gmra.mrb[0].mxu0 %v273
    %v358 = vpop.f32.mrb[0].mxu0
    %v359 = vadd.f32 %v257, %v358
    %v360 = vpop.f32.mrb[0].mxu0
    %361 = vmatprep.mubr.f32.mxu0 0.0
    %362 = vmatmul.mubr.f32.gmra.mrb[0].mxu0 %v276
    %v363 = vpop.f32.mrb[0].mxu0
    %v364 = vadd.f32 %v262, %v363
    %v365 = vpop.f32.mrb[0].mxu0
    %366 = vdwg.mxu0
    %v367 = vld [vmem:[%s5] sm:$0xff]
    %v368 = vld [vmem:[%s5 + $0x8] sm:$0xff]
    %v369 = vld [vmem:[%s5 + $0x10] sm:$0xff]
    %v370 = vld [vmem:[%s5 + $0x18] sm:$0xff]
    %372 = vset.pattern.permute.xlu0 0
    %373 = vperm.xlu0 %372, %v367
    %v374 = vpop.permute.xlu0 %373
    %377 = vset.pattern.permute.xlu0 0
    %378 = vperm.xlu0 %377, %v368
    %v379 = vpop.permute.xlu0 %378
    %382 = vset.pattern.permute.xlu0 0
    %383 = vperm.xlu0 %382, %v369
    %v384 = vpop.permute.xlu0 %383
    %387 = vset.pattern.permute.xlu0 0
    %388 = vperm.xlu0 %387, %v370
    %v389 = vpop.permute.xlu0 %388
    %v391 = vadd.f32 %v349, %v374
    %v392 = vadd.f32 %v354, %v379
    %v393 = vadd.f32 %v359, %v384
    %v394 = vadd.f32 %v364, %v389
    %vm395 = vcmp.ge.f32.partialorder %v391, 0.0
    %vm396 = vcmp.ge.f32.partialorder %v392, 0.0
    %vm397 = vcmp.ge.f32.partialorder %v393, 0.0
    %vm398 = vcmp.ge.f32.partialorder %v394, 0.0
    %v399 = vmul.f32 %v391, 0.25
    %v400 = vmul.f32 %v392, 0.25
    %v401 = vmul.f32 %v393, 0.25
    %v402 = vmul.f32 %v394, 0.25
    %v403 = vsel %vm395, %v391, %v399
    %v404 = vsel %vm396, %v392, %v400
    %v405 = vsel %vm397, %v393, %v401
    %v406 = vsel %vm398, %v394, %v402
    %v407 = vld [vmem:[%s6] sm:$0xff]
    %v408 = vld [vmem:[%s6 + $0x8] sm:$0xff]
    %v409 = vld [vmem:[%s6 + $0x10] sm:$0xff]
    %v410 = vld [vmem:[%s6 + $0x18] sm:$0xff]
    %v411 = vld [vmem:[%s7] sm:$0xff]
    %v412 = vld [vmem:[%s7 + $0x8] sm:$0xff]
    %v413 = vld [vmem:[%s7 + $0x10] sm:$0xff]
    %v414 = vld [vmem:[%s7 + $0x18] sm:$0xff]
    %416 = vset.pattern.permute.xlu0 0
    %417 = vperm.xlu0 %416, %v411
    %v418 = vpop.permute.xlu0 %417
    %421 = vset.pattern.permute.xlu0 0
    %422 = vperm.xlu0 %421, %v412
    %v423 = vpop.permute.xlu0 %422
    %426 = vset.pattern.permute.xlu0 0
    %427 = vperm.xlu0 %426, %v413
    %v428 = vpop.permute.xlu0 %427
    %431 = vset.pattern.permute.xlu0 0
    %432 = vperm.xlu0 %431, %v414
    %v433 = vpop.permute.xlu0 %432
    %vm435 = vcmask 261120
    %v437 = vsel %vm435, %v407, 0
    %v440 = vsel %vm435, %v408, 0
    %v443 = vsel %vm435, %v409, 0
    %v446 = vsel %vm435, %v410, 0
    %448 = vmatprep.subr.mxu0 0.0
    %449 = vmatpush1.msra.mxu0 %v403
    %450 = vmatprep.subr.mxu0 0.0
    %451 = vmatpush1.msra.mxu0 %v404
    %452 = vmatprep.subr.mxu0 0.0
    %453 = vmatpush1.msra.mxu0 %v405
    %454 = vmatprep.subr.mxu0 0.0
    %455 = vmatpush1.msra.mxu0 %v406
    %456 = vmatprep.subr.mxu0 0.0
    %457 = vmatpush1.msra.mxu0 0.0
    %458 = vmatprep.subr.mxu0 0.0
    %459 = vmatpush1.msra.mxu0 0.0
    %460 = vmatprep.subr.mxu0 0.0
    %461 = vmatpush1.msra.mxu0 0.0
    %462 = vmatprep.subr.mxu0 0.0
    %463 = vmatpush1.msra.mxu0 0.0
    %464 = vmatprep.subr.mxu0 0.0
    %465 = vmatpush1.msra.mxu0 0.0
    %466 = vmatprep.subr.mxu0 0.0
    %467 = vmatpush1.msra.mxu0 0.0
    %468 = vmatprep.subr.mxu0 0.0
    %469 = vmatpush1.msra.mxu0 0.0
    %470 = vmatprep.subr.mxu0 0.0
    %471 = vmatpush1.msra.mxu0 0.0
    %472 = vmatprep.subr.mxu0 0.0
    %473 = vmatpush1.msra.mxu0 0.0
    %474 = vmatprep.subr.mxu0 0.0
    %475 = vmatpush1.msra.mxu0 0.0
    %476 = vmatprep.subr.mxu0 0.0
    %477 = vmatpush1.msra.mxu0 0.0
    %478 = vmatprep.subr.mxu0 0.0
    %479 = vmatpush1.msra.mxu0 0.0
    %480 = vmatprep.subr.mxu0 0.0
    %481 = vmatpush1.msra.mxu0 0.0
    %482 = vmatprep.subr.mxu0 0.0
    %483 = vmatpush1.msra.mxu0 0.0
    %484 = vmatprep.subr.mxu0 0.0
    %485 = vmatpush1.msra.mxu0 0.0
    %486 = vmatprep.subr.mxu0 0.0
    %487 = vmatpush1.msra.mxu0 0.0
    %488 = vmatprep.subr.mxu0 0.0
    %489 = vmatpush1.msra.mxu0 0.0
    %490 = vmatprep.subr.mxu0 0.0
    %491 = vmatpush1.msra.mxu0 0.0
    %492 = vmatprep.subr.mxu0 0.0
    %493 = vmatpush1.msra.mxu0 0.0
    %494 = vmatprep.subr.mxu0 0.0
    %495 = vmatpush1.msra.mxu0 0.0
    %496 = vmatprep.subr.mxu0 0.0
    %497 = vmatpush1.msra.mxu0 0.0
    %498 = vmatprep.subr.mxu0 0.0
    %499 = vmatpush1.msra.mxu0 0.0
    %500 = vmatprep.subr.mxu0 0.0
    %501 = vmatpush1.msra.mxu0 0.0
    %502 = vmatprep.subr.mxu0 0.0
    %503 = vmatpush1.msra.mxu0 0.0
    %504 = vmatprep.subr.mxu0 0.0
    %505 = vmatpush1.msra.mxu0 0.0
    %506 = vmatprep.subr.mxu0 0.0
    %507 = vmatpush1.msra.mxu0 0.0
    %508 = vmatprep.subr.mxu0 0.0
    %509 = vmatpush1.msra.mxu0 0.0
    %510 = vmatprep.subr.mxu0 0.0
    %511 = vmatpush1.msra.mxu0 0.0
    %512 = vmatprep.mubr.f32.mxu0 0.0
    %513 = vmatmul.mubr.f32.gmra.mrb[0].mxu0 %v437
    %v514 = vpop.f32.mrb[0].mxu0
    %v515 = vadd.f32 %v418, %v514
    %v516 = vpop.f32.mrb[0].mxu0
    %517 = vmatprep.mubr.f32.mxu0 0.0
    %518 = vmatmul.mubr.f32.gmra.mrb[0].mxu0 %v440
    %v519 = vpop.f32.mrb[0].mxu0
    %v520 = vadd.f32 %v423, %v519
    %v521 = vpop.f32.mrb[0].mxu0
    %522 = vmatprep.mubr.f32.mxu0 0.0
    %523 = vmatmul.mubr.f32.gmra.mrb[0].mxu0 %v443
    %v524 = vpop.f32.mrb[0].mxu0
    %v525 = vadd.f32 %v428, %v524
    %v526 = vpop.f32.mrb[0].mxu0
    %527 = vmatprep.mubr.f32.mxu0 0.0
    %528 = vmatmul.mubr.f32.gmra.mrb[0].mxu0 %v446
    %v529 = vpop.f32.mrb[0].mxu0
    %v530 = vadd.f32 %v433, %v529
    %v531 = vpop.f32.mrb[0].mxu0
    %532 = vdwg.mxu0
    %vm533 = vcmp.ge.f32.partialorder %v515, 0.0
    %vm534 = vcmp.ge.f32.partialorder %v520, 0.0
    %vm535 = vcmp.ge.f32.partialorder %v525, 0.0
    %vm536 = vcmp.ge.f32.partialorder %v530, 0.0
    %v537 = vmul.f32 %v515, 0.25
    %v538 = vmul.f32 %v520, 0.25
    %v539 = vmul.f32 %v525, 0.25
    %v540 = vmul.f32 %v530, 0.25
    %v541 = vsel %vm533, %v515, %v537
    %v542 = vsel %vm534, %v520, %v538
    %v543 = vsel %vm535, %v525, %v539
    %v544 = vsel %vm536, %v530, %v540
    %v545 = vld [vmem:[%s8] sm:$0x7]
    %v546 = vld [vmem:[%s9] sm:$0x7]
    %548 = vset.pattern.permute.xlu0 0
    %549 = vperm.xlu0 %548, %v546
    %v550 = vpop.permute.xlu0 %549
    %v553 = vsel %vm435, %v545, 0
    %555 = vmatprep.subr.mxu0 0.0
    %556 = vmatpush1.msra.mxu0 %v541
    %557 = vmatprep.subr.mxu0 0.0
    %558 = vmatpush1.msra.mxu0 %v542
    %559 = vmatprep.subr.mxu0 0.0
    %560 = vmatpush1.msra.mxu0 %v543
    %561 = vmatprep.subr.mxu0 0.0
    %562 = vmatpush1.msra.mxu0 %v544
    %563 = vmatprep.subr.mxu0 0.0
    %564 = vmatpush1.msra.mxu0 0.0
    %565 = vmatprep.subr.mxu0 0.0
    %566 = vmatpush1.msra.mxu0 0.0
    %567 = vmatprep.subr.mxu0 0.0
    %568 = vmatpush1.msra.mxu0 0.0
    %569 = vmatprep.subr.mxu0 0.0
    %570 = vmatpush1.msra.mxu0 0.0
    %571 = vmatprep.subr.mxu0 0.0
    %572 = vmatpush1.msra.mxu0 0.0
    %573 = vmatprep.subr.mxu0 0.0
    %574 = vmatpush1.msra.mxu0 0.0
    %575 = vmatprep.subr.mxu0 0.0
    %576 = vmatpush1.msra.mxu0 0.0
    %577 = vmatprep.subr.mxu0 0.0
    %578 = vmatpush1.msra.mxu0 0.0
    %579 = vmatprep.subr.mxu0 0.0
    %580 = vmatpush1.msra.mxu0 0.0
    %581 = vmatprep.subr.mxu0 0.0
    %582 = vmatpush1.msra.mxu0 0.0
    %583 = vmatprep.subr.mxu0 0.0
    %584 = vmatpush1.msra.mxu0 0.0
    %585 = vmatprep.subr.mxu0 0.0
    %586 = vmatpush1.msra.mxu0 0.0
    %587 = vmatprep.subr.mxu0 0.0
    %588 = vmatpush1.msra.mxu0 0.0
    %589 = vmatprep.subr.mxu0 0.0
    %590 = vmatpush1.msra.mxu0 0.0
    %591 = vmatprep.subr.mxu0 0.0
    %592 = vmatpush1.msra.mxu0 0.0
    %593 = vmatprep.subr.mxu0 0.0
    %594 = vmatpush1.msra.mxu0 0.0
    %595 = vmatprep.subr.mxu0 0.0
    %596 = vmatpush1.msra.mxu0 0.0
    %597 = vmatprep.subr.mxu0 0.0
    %598 = vmatpush1.msra.mxu0 0.0
    %599 = vmatprep.subr.mxu0 0.0
    %600 = vmatpush1.msra.mxu0 0.0
    %601 = vmatprep.subr.mxu0 0.0
    %602 = vmatpush1.msra.mxu0 0.0
    %603 = vmatprep.subr.mxu0 0.0
    %604 = vmatpush1.msra.mxu0 0.0
    %605 = vmatprep.subr.mxu0 0.0
    %606 = vmatpush1.msra.mxu0 0.0
    %607 = vmatprep.subr.mxu0 0.0
    %608 = vmatpush1.msra.mxu0 0.0
    %609 = vmatprep.subr.mxu0 0.0
    %610 = vmatpush1.msra.mxu0 0.0
    %611 = vmatprep.subr.mxu0 0.0
    %612 = vmatpush1.msra.mxu0 0.0
    %613 = vmatprep.subr.mxu0 0.0
    %614 = vmatpush1.msra.mxu0 0.0
    %615 = vmatprep.subr.mxu0 0.0
    %616 = vmatpush1.msra.mxu0 0.0
    %617 = vmatprep.subr.mxu0 0.0
    %618 = vmatpush1.msra.mxu0 0.0
    %619 = vmatprep.mubr.f32.mxu0 0.0
    %620 = vmatmul.mubr.f32.gmra.mrb[0].mxu0 %v553
    %v621 = vpop.f32.mrb[0].mxu0
    %v622 = vadd.f32 %v550, %v621
    %v623 = vpop.f32.mrb[0].mxu0
    %624 = vdwg.mxu0
    %625 = vst [vmem:[#allocation2] sm:$0x7] %v622
    // Predicated region
    $region42: #{tpu_custom_call.1} parent=1 // pred_check
      _
    $region43: #{tpu_custom_call.1} parent=1 // pred_check_branch
      %627 = sbr.rel (0) target = $region45
    $region44: #{tpu_custom_call.1} parent=1 // pred_region
      %s629 = ssub.s32 64, 64
      %630 = vsyncadd [#allocation3], %s629
      %s632 = sshll.u32 [#allocation2], 4
      %s633 = int_to_ptr.vmem [resolvable:$true] %s632
      %635 = dma.vmem_to_hbm [thread:$0]  %s633, 64, %s10, [#allocation3]
    $region45: #{tpu_custom_call.1} parent=1 // pred_fallthru
      _
    // Predicated region
    $region46: #{tpu_custom_call.1} parent=1 // pred_check
      _
    $region47: #{tpu_custom_call.1} parent=1 // pred_check_branch
      %637 = sbr.rel (0) target = $region49
    $region48: #{tpu_custom_call.1} parent=1 // pred_region
      %638 = dma.done [#allocation3], 64
    $region49: #{tpu_custom_call.1} parent=1 // pred_fallthru
      _
    %639 = vsyncpa [#allocation3], 1

</llo_original>
